<compile_context>
chip_gen: v7x
topology: tpu7x:2x2x1
jax: 0.10.0
libtpu: 0.0.40
codegen_flags: <defaults>
</compile_context>

<pallas_src>
import functools
import math

import jax
import jax.numpy as jnp
from jax.experimental import pallas as pl
from jax.experimental.pallas import tpu as pltpu

# Hyperparameters from the module's __init__ (deterministic, in-script).
OMEGA = 14.0
THETA = 0.5
EPSILON = 1.0
ALPHA = 2.1

# Pre-folded constants (r = theta / epsilon).
_R = THETA / EPSILON
LOG_R = math.log(_R)                  # r**p = exp(p * log r): one EUP exp
INV_OMEGA = 1.0 / OMEGA
A_COEF = OMEGA / (EPSILON * _R)       # omega * (1/eps) * (1/r)

LANES = 128
TARGET_BLOCK_ROWS = 8192              # (8192, 128) f32 = 4 MiB / input / grid step
CHUNK_ROWS = 256                      # inner-loop tile: (256, 128) f32 temps = 128 KiB


def _cdiv(a, b):
    return -(-a // b)


def _round_up(x, m):
    return _cdiv(x, m) * m


def _awl_kernel(pred_ref, targ_ref, out_ref, *,
                block_rows, chunk_rows, n_rows, need_mask):
    """One grid step: adaptive-wing loss over a (block_rows, 128) tile,
    reduced to the (8, 128) f32 partial-sum tile owned by this step.

    The elementwise math runs in an inner fori_loop over (chunk_rows, 128)
    sub-tiles carrying a single (8, 128) accumulator, so no block-sized
    temporary is materialized in VMEM even at 8192-row blocks.
    """
    i = pl.program_id(0)
    n_chunks = block_rows // chunk_rows

    def chunk_body(c, acc):
        start = pl.multiple_of(c * chunk_rows, chunk_rows)
        y_hat = pred_ref[pl.ds(start, chunk_rows), :].astype(jnp.float32)
        y = targ_ref[pl.ds(start, chunk_rows), :].astype(jnp.float32)

        delta = jnp.abs(y - y_hat)
        p = ALPHA - y                         # elementwise exponent (alpha - y)
        small = delta < THETA

        # Single shared transcendental chain (1 log + 1 exp + 1 log1p + 1 vrcp):
        #   small branch: t = (delta/omega)**p, loss = omega*log1p(t)
        #   large branch: t = r**p,             loss = A*(delta-theta) + omega*log1p(t)
        L = jnp.where(small, jnp.log(delta * INV_OMEGA), LOG_R)
        t = jnp.exp(p * L)
        base = OMEGA * jnp.log1p(t)
        A = (A_COEF * p) * (t * pl.reciprocal(1.0 + t, approx=True))
        loss = base + jnp.where(small, 0.0, A * (delta - THETA))

        if need_mask:
            # Only traced when the last grid block is ragged: zero rows past
            # the true row count (Pallas-padded garbage; NaNs in the
            # unselected branch do not propagate through the select).
            rid = (i * block_rows + start
                   + jax.lax.broadcasted_iota(jnp.int32, loss.shape, 0))
            loss = jnp.where(rid < n_rows, loss, 0.0)

        # (chunk_rows,128) -> (chunk_rows/8, 8, 128): pure (8,128)-tile regroup.
        return acc + loss.reshape(-1, 8, LANES).sum(axis=0)

    out_ref[...] = jax.lax.fori_loop(
        0, n_chunks, chunk_body, jnp.zeros((8, LANES), jnp.float32))


def _choose_tiling(rows):
    """Pick (block_rows, chunk_rows, num_blocks): blocks <= TARGET rows,
    >= 2 balanced blocks when possible (v7x megacore), multiples of 8 (and of
    CHUNK_ROWS when large enough for the inner loop to tile them evenly)."""
    nb = max(2, _cdiv(rows, TARGET_BLOCK_ROWS))
    block_rows = _round_up(_cdiv(rows, nb), 8)
    if block_rows > CHUNK_ROWS:
        block_rows = _round_up(block_rows, CHUNK_ROWS)
        chunk_rows = CHUNK_ROWS
    else:
        chunk_rows = block_rows
    num_blocks = _cdiv(rows, block_rows)
    return block_rows, chunk_rows, num_blocks


def adaptive_wing_loss(pred, target):
    """pred, target: (B, N, H, H) arrays (any float dtype). Returns scalar f32 loss."""
    assert pred.shape == target.shape
    n_total = int(pred.size)

    flat_p = pred.reshape(-1)
    flat_t = target.reshape(-1)
    # Pad with zeros only when numel is not already lane/sublane friendly
    # (never triggers for typical BxNxHxH heatmaps, so no extra HBM pass in
    # the common case). Zero-padded elements contribute exactly 0 loss
    # (delta=0 -> omega*log1p(0)=0); the divisor stays the true n_total.
    padded = max(_round_up(n_total, LANES), 8 * LANES)
    if padded != n_total:
        flat_p = jnp.pad(flat_p, (0, padded - n_total))
        flat_t = jnp.pad(flat_t, (0, padded - n_total))
    rows = padded // LANES
    p2d = flat_p.reshape(rows, LANES)
    t2d = flat_t.reshape(rows, LANES)

    block_rows, chunk_rows, num_blocks = _choose_tiling(rows)
    need_mask = (rows % block_rows) != 0

    itemsize = jnp.dtype(pred.dtype).itemsize
    cost = pl.CostEstimate(
        flops=15 * n_total,
        transcendentals=4 * n_total,
        bytes_accessed=2 * n_total * itemsize + num_blocks * 8 * LANES * 4,
    )

    partials = pl.pallas_call(
        functools.partial(
            _awl_kernel,
            block_rows=block_rows,
            chunk_rows=chunk_rows,
            n_rows=rows,
            need_mask=need_mask,
        ),
        out_shape=jax.ShapeDtypeStruct((num_blocks, 8, LANES), jnp.float32),
        grid_spec=pltpu.PrefetchScalarGridSpec(
            num_scalar_prefetch=0,
            grid=(num_blocks,),
            in_specs=[
                pl.BlockSpec((block_rows, LANES), lambda i: (i, 0)),
                pl.BlockSpec((block_rows, LANES), lambda i: (i, 0)),
            ],
            out_specs=pl.BlockSpec(
                (pl.Squeezed(), 8, LANES), lambda i: (i, 0, 0)),
        ),
        compiler_params=pltpu.CompilerParams(
            dimension_semantics=("parallel",),
            # 2 inputs x 2 pipeline buffers x 4 MiB (f32, 8192-row blocks)
            # = 16 MiB; temps are bounded by the 256-row inner chunk, so
            # 32 MiB is comfortable on v5e/v6e/v7x alike.
            vmem_limit_bytes=32 * 1024 * 1024,
        ),
        cost_estimate=cost,
    )(p2d, t2d)

    return jnp.sum(partials) / jnp.float32(n_total)


def adaptive_wing_loss_ref(pred, target):
    """Pure-JAX reference mirroring the PyTorch forward semantics."""
    y = target.astype(jnp.float32)
    y_hat = pred.astype(jnp.float32)
    delta = jnp.abs(y - y_hat)
    p = ALPHA - y
    r = THETA / EPSILON
    loss_small = OMEGA * jnp.log1p(jnp.power(delta / OMEGA, p))
    r_pow_p = jnp.power(r, p)
    A = OMEGA * (1.0 / (1.0 + r_pow_p)) * p * jnp.power(r, p - 1.0) * (1.0 / EPSILON)
    C = THETA * A - OMEGA * jnp.log1p(r_pow_p)
    loss_large = A * delta - C
    loss = jnp.where(delta < THETA, loss_small, loss_large)
    return jnp.sum(loss) / loss.size


if __name__ == "__main__":
    key = jax.random.PRNGKey(0)
    k1, k2 = jax.random.split(key)
    B, N, H = 2, 4, 16
    # Heatmap-like values in [0, 1] so both branches (delta < theta and
    # delta >= theta) are exercised.
    pred = jax.random.uniform(k1, (B, N, H, H), dtype=jnp.float32)
    target = jax.random.uniform(k2, (B, N, H, H), dtype=jnp.float32)

    out = adaptive_wing_loss(pred, target)
    out = jax.block_until_ready(out)

    ref = adaptive_wing_loss_ref(pred, target)
    # rtol loosened vs 1e-4: pl.reciprocal(approx=True) in the delta >= theta
    # branch introduces ~1e-4-level relative error (fine for a training loss).
    assert jnp.allclose(out, ref, rtol=1e-3, atol=1e-5), (out, ref)

    print("KERNEL_OK")
</pallas_src>

<mosaic_0001>
module attributes {stable_mosaic.version = 11 : i64} {
  func.func @_awl_kernel(%arg0: i32, %arg1: memref<8x128xf32, #tpu.memory_space<vmem>>, %arg2: memref<8x128xf32, #tpu.memory_space<vmem>>, %arg3: memref<1x8x128xf32, #tpu.memory_space<vmem>>) attributes {dimension_semantics = [#tpu.dimension_semantics<parallel>], iteration_bounds = array<i64: 2>, scalar_prefetch = 0 : i64, scratch_operands = 0 : i64, tpu.core_type = #tpu.core_type<tc>, window_params = [{transform_indices = @transform_0, window_bounds = array<i64: 8, 128>}, {transform_indices = @transform_1, window_bounds = array<i64: 8, 128>}, {transform_indices = @transform_2, window_bounds = array<i64: 1, 8, 128>}]} {
    %cst = arith.constant 0.000000e+00 : f32
    %0 = vector.broadcast %cst : f32 to vector<8x128xf32>
    %c0_i32 = arith.constant 0 : i32
    %c8_i32 = arith.constant 8 : i32
    %1 = arith.muli %c0_i32, %c8_i32 : i32
    %2 = tpu.assume_multiple %1, 8 : i32
    %3 = arith.index_cast %2 : i32 to index
    %c0 = arith.constant 0 : index
    %4 = vector.load %arg1[%3, %c0] : memref<8x128xf32, #tpu.memory_space<vmem>>, vector<8x128xf32>
    %5 = arith.index_cast %2 : i32 to index
    %c0_0 = arith.constant 0 : index
    %6 = vector.load %arg2[%5, %c0_0] : memref<8x128xf32, #tpu.memory_space<vmem>>, vector<8x128xf32>
    %7 = arith.subf %6, %4 : vector<8x128xf32>
    %8 = math.absf %7 : vector<8x128xf32>
    %cst_1 = arith.constant 2.100000e+00 : f32
    %9 = vector.broadcast %cst_1 : f32 to vector<8x128xf32>
    %10 = arith.subf %9, %6 : vector<8x128xf32>
    %cst_2 = arith.constant 5.000000e-01 : f32
    %11 = vector.broadcast %cst_2 : f32 to vector<8x128xf32>
    %12 = arith.cmpf olt, %8, %11 : vector<8x128xf32>
    %cst_3 = arith.constant 0.0714285746 : f32
    %13 = vector.broadcast %cst_3 : f32 to vector<8x128xf32>
    %14 = arith.mulf %8, %13 : vector<8x128xf32>
    %15 = math.log %14 : vector<8x128xf32>
    %cst_4 = arith.constant -0.693147182 : f32
    %16 = vector.broadcast %cst_4 : f32 to vector<8x128xf32>
    %17 = arith.select %12, %15, %16 : vector<8x128xi1>, vector<8x128xf32>
    %18 = arith.mulf %10, %17 : vector<8x128xf32>
    %19 = math.exp %18 : vector<8x128xf32>
    %20 = math.log1p %19 : vector<8x128xf32>
    %cst_5 = arith.constant 1.400000e+01 : f32
    %21 = vector.broadcast %cst_5 : f32 to vector<8x128xf32>
    %22 = arith.mulf %21, %20 : vector<8x128xf32>
    %cst_6 = arith.constant 2.800000e+01 : f32
    %23 = vector.broadcast %cst_6 : f32 to vector<8x128xf32>
    %24 = arith.mulf %23, %10 : vector<8x128xf32>
    %cst_7 = arith.constant 1.000000e+00 : f32
    %25 = vector.broadcast %cst_7 : f32 to vector<8x128xf32>
    %26 = arith.addf %25, %19 : vector<8x128xf32>
    %27 = tpu.reciprocal %26 {approx = true} : vector<8x128xf32> -> vector<8x128xf32>
    %28 = arith.mulf %19, %27 : vector<8x128xf32>
    %29 = arith.mulf %24, %28 : vector<8x128xf32>
    %cst_8 = arith.constant 5.000000e-01 : f32
    %30 = vector.broadcast %cst_8 : f32 to vector<8x128xf32>
    %31 = arith.subf %8, %30 : vector<8x128xf32>
    %32 = arith.mulf %29, %31 : vector<8x128xf32>
    %cst_9 = arith.constant 0.000000e+00 : f32
    %33 = vector.broadcast %cst_9 : f32 to vector<8x128xf32>
    %34 = arith.select %12, %33, %32 : vector<8x128xi1>, vector<8x128xf32>
    %35 = arith.addf %22, %34 : vector<8x128xf32>
    %36 = vector.shape_cast %35 : vector<8x128xf32> to vector<1x8x128xf32>
    %cst_10 = arith.constant dense<0.000000e+00> : vector<8x128xf32>
    %37 = vector.multi_reduction <add>, %36, %cst_10 [0] : vector<1x8x128xf32> to vector<8x128xf32>
    %38 = arith.addf %0, %37 : vector<8x128xf32>
    %c1_i32 = arith.constant 1 : i32
    %c0_11 = arith.constant 0 : index
    %c0_12 = arith.constant 0 : index
    %c0_13 = arith.constant 0 : index
    %39 = vector.load %arg3[%c0_11, %c0_12, %c0_13] : memref<1x8x128xf32, #tpu.memory_space<vmem>>, vector<1x8x128xf32>
    %40 = vector.shape_cast %39 : vector<1x8x128xf32> to vector<8x128xf32>
    %41 = vector.shape_cast %38 : vector<8x128xf32> to vector<1x8x128xf32>
    tpu.vector_store %arg3[%c0_11, %c0_12, %c0_13], %41 {strides = array<i32>} : memref<1x8x128xf32, #tpu.memory_space<vmem>>, vector<1x8x128xf32>,
    return
  }
  func.func @transform_0(%arg0: i32) -> (i32, i32) {
    %c0_i32 = arith.constant 0 : i32
    %c0_i32_0 = arith.constant 0 : i32
    return %arg0, %c0_i32 : i32, i32
  }
  func.func @transform_1(%arg0: i32) -> (i32, i32) {
    %c0_i32 = arith.constant 0 : i32
    %c0_i32_0 = arith.constant 0 : i32
    return %arg0, %c0_i32 : i32, i32
  }
  func.func @transform_2(%arg0: i32) -> (i32, i32, i32) {
    %c0_i32 = arith.constant 0 : i32
    %c0_i32_0 = arith.constant 0 : i32
    %c0_i32_1 = arith.constant 0 : i32
    return %arg0, %c0_i32, %c0_i32_0 : i32, i32, i32
  }
}

</mosaic_0001>

<llo_original>
// kernel: tpu_custom_call.1
$region0: #{tpu_custom_call.1}
  #allocation0 [shape = 'u32[]', space=smem, size = 0x4, offset = 0x4, fixed_abs, tag = 'smem constant byte address 0x4 - core index']
  #allocation1 [shape = 'u32[144,128]{1,0:T(1,128)}', space=vmem, size = 0x12000, scoped, tag = 'internal scratch']
  %s0 = inlined_call_operand.hbm [shape: f32[16,128], index: 0, kind: input, shape index: {}]
  %s1 = inlined_call_operand.hbm [shape: f32[16,128], index: 1, kind: input, shape index: {}]
  %s2 = inlined_call_operand.hbm [shape: f32[2,8,128], index: 2, kind: output, shape index: {}]
  %s3 = sld [smem:[#allocation0]]
  $region49: #{tpu_custom_call.1} parent=0
    _
  %s5 = ssub.s32 1, %s3
  %s6 = scalar_select 0, %s5, %s3
  $region1: #{tpu_custom_call.1} parent=0
    #allocation2 [shape = 'u8[8192]{0}', space=vmem, size = 0x2000, scoped, tag = 'input window, operand 0']
    #allocation3 [shape = 's32[2]{0}', space=sflag, size = 0x8, scoped, tag = 'scoped memory for tpu_custom_call.1']
    #allocation4 [shape = 's32[2]{0}', space=sflag, size = 0x8, scoped, tag = 'scoped memory for tpu_custom_call.1']
    #allocation5 [shape = 'u8[8192]{0}', space=vmem, size = 0x2000, scoped, tag = 'input window, operand 1']
    #allocation6 [shape = 's32[2]{0}', space=sflag, size = 0x8, scoped, tag = 'scoped memory for tpu_custom_call.1']
    #allocation7 [shape = 'u8[8192]{0}', space=vmem, size = 0x2000, scoped, tag = 'output window, operand 0']
    %7 = vsyncpa [#allocation3], 0
    %s8 = scalar_lea.sflag [#allocation3], 1
    %9 = vsyncpa %s8, 0
    %10 = vsyncpa [#allocation6], 0
    %s11 = scalar_lea.sflag [#allocation6], 1
    %12 = vsyncpa %s11, 0
    %13 = vsyncpa [#allocation4], 0
    %s14 = scalar_lea.sflag [#allocation4], 1
    %15 = vsyncpa %s14, 0
    loop: start=0, step=1, limit=4
    $region2: #{tpu_custom_call.1} parent=1 // loop_pre_header
      _
    $region3: #{tpu_custom_call.1} parent=1 // loop_header
      %s17 = sphi 0, %s21
      %p18 = scmp.ge.s32.totalorder %s17, 4
      %s27 = sphi 0, %s29
      %s30 = sphi 0, %s27
      %s31 = sphi 0, %s30
      %s47 = sphi 0, %s31
      %s53 = sphi 0, %s55
      %s56 = sphi 0, %s53
      %s57 = sphi 0, %s56
      %s73 = sphi 0, %s57
      %s79 = sphi 0, %s81
      %s82 = sphi 0, %s79
      %s83 = sphi 0, %s82
      %s99 = sphi 0, %s83
    $region4: #{tpu_custom_call.1} parent=1 // loop_header_branch
      %20 = sbr.rel (%p18) target = $region8
    $region5: #{tpu_custom_call.1} parent=1 // loop_body
      %s22 = ssub.s32 %s17, 1
      %s23 = ssub.s32 %s17, 2
      %s24 = sadd.s32 %s17, 1
      %s25 = ssub.s32 %s17, %s24
      %p26 = scmp.eq.s32.totalorder %s25, 0
      %s28 = sadd.s32 %s27, 1
      %s29 = scalar_select %p26, %s27, %s28
      %p32 = pneg %p26
      %p33 = scmp.eq.s32.totalorder %s17, 1
      %p34 = por %p32, %p33
      %p35 = scmp.ne.s32.totalorder %s27, %s30
      %p36 = scmp.eq.s32.totalorder %s17, 0
      %p37 = por %p35, %p36
      %p38 = scmp.ne.s32.totalorder %s27, %s30
      %p39 = scmp.eq.s32.totalorder %s22, 1
      %p40 = por %p38, %p39
      %p41 = scmp.ne.s32.totalorder %s30, %s31
      %p42 = scmp.eq.s32.totalorder %s22, 0
      %p43 = por %p41, %p42
      %p44 = scmp.ne.s32.totalorder %s30, %s31
      %p45 = scmp.eq.s32.totalorder %s23, 1
      %p46 = por %p44, %p45
      %p48 = scmp.ne.s32.totalorder %s31, %s47
      %p49 = scmp.eq.s32.totalorder %s23, 0
      %p50 = por %p48, %p49
      %s51 = ssub.s32 %s17, %s24
      %p52 = scmp.eq.s32.totalorder %s51, 0
      %s54 = sadd.s32 %s53, 1
      %s55 = scalar_select %p52, %s53, %s54
      %p58 = pneg %p52
      %p59 = scmp.eq.s32.totalorder %s17, 1
      %p60 = por %p58, %p59
      %p61 = scmp.ne.s32.totalorder %s53, %s56
      %p62 = scmp.eq.s32.totalorder %s17, 0
      %p63 = por %p61, %p62
      %p64 = scmp.ne.s32.totalorder %s53, %s56
      %p65 = scmp.eq.s32.totalorder %s22, 1
      %p66 = por %p64, %p65
      %p67 = scmp.ne.s32.totalorder %s56, %s57
      %p68 = scmp.eq.s32.totalorder %s22, 0
      %p69 = por %p67, %p68
      %p70 = scmp.ne.s32.totalorder %s56, %s57
      %p71 = scmp.eq.s32.totalorder %s23, 1
      %p72 = por %p70, %p71
      %p74 = scmp.ne.s32.totalorder %s57, %s73
      %p75 = scmp.eq.s32.totalorder %s23, 0
      %p76 = por %p74, %p75
      %s77 = ssub.s32 %s17, %s24
      %p78 = scmp.eq.s32.totalorder %s77, 0
      %s80 = sadd.s32 %s79, 1
      %s81 = scalar_select %p78, %s79, %s80
      %p84 = pneg %p78
      %p85 = scmp.eq.s32.totalorder %s17, 1
      %p86 = por %p84, %p85
      %p87 = scmp.ne.s32.totalorder %s79, %s82
      %p88 = scmp.eq.s32.totalorder %s17, 0
      %p89 = por %p87, %p88
      %p90 = scmp.ne.s32.totalorder %s79, %s82
      %p91 = scmp.eq.s32.totalorder %s22, 1
      %p92 = por %p90, %p91
      %p93 = scmp.ne.s32.totalorder %s82, %s83
      %p94 = scmp.eq.s32.totalorder %s22, 0
      %p95 = por %p93, %p94
      %p96 = scmp.ne.s32.totalorder %s82, %s83
      %p97 = scmp.eq.s32.totalorder %s23, 1
      %p98 = por %p96, %p97
      %p100 = scmp.ne.s32.totalorder %s83, %s99
      %p101 = scmp.eq.s32.totalorder %s23, 0
      %p102 = por %p100, %p101
      %p103 = scmp.le.s32.totalorder 1, %s17
      %p104 = scmp.lt.s32.totalorder %s17, 3
      %p105 = pnand %p103, %p104
      %p106 = pneg %p105
      // Predicated region
      $region9: #{tpu_custom_call.1} parent=5 // pred_check
        _
      $region10: #{tpu_custom_call.1} parent=5 // pred_check_branch
        %108 = sbr.rel (%p105) target = $region12
      $region11: #{tpu_custom_call.1} parent=5 // pred_region
        %s109 = ssub.s32 %s17, 1
      $region12: #{tpu_custom_call.1} parent=5 // pred_fallthru
        _
      %p110 = scmp.lt.s32.totalorder %s17, 2
      // Predicated region
      $region13: #{tpu_custom_call.1} parent=5 // pred_check
        %p111 = pneg %p110
      $region14: #{tpu_custom_call.1} parent=5 // pred_check_branch
        %113 = sbr.rel (%p111) target = $region16
      $region15: #{tpu_custom_call.1} parent=5 // pred_region
        // Predicated region
        $region17: #{tpu_custom_call.1} parent=15 // pred_check
          %p114 = pneg %p37
        $region18: #{tpu_custom_call.1} parent=15 // pred_check_branch
          %116 = sbr.rel (%p114) target = $region20
        $region19: #{tpu_custom_call.1} parent=15 // pred_region
          %s117 = sand.u32 %s27, 1
          %s118 = scalar_lea.sflag [#allocation3], %s117
          %s119 = sand.u32 %s27, 1
          %s120 = smul.addr %s119, 8
          %s121 = scalar_lea.vmem [#allocation2], %s120
          %s123 = ssub.s32 128, 128
          %124 = vsyncadd %s118, %s123
          %s125 = smul.addr %s17, 128
          %s126 = scalar_lea.hbm %s0, %s125
          %s128 = sshll.u32 %s121, 4
          %s129 = int_to_ptr.vmem [resolvable:$true] %s128
          %131 = dma.hbm_to_vmem [thread:$0]  %s126, 128, %s129, %s118
        $region20: #{tpu_custom_call.1} parent=15 // pred_fallthru
          _
        // Predicated region
        $region21: #{tpu_custom_call.1} parent=15 // pred_check
          %p132 = pneg %p63
        $region22: #{tpu_custom_call.1} parent=15 // pred_check_branch
          %134 = sbr.rel (%p132) target = $region24
        $region23: #{tpu_custom_call.1} parent=15 // pred_region
          %s135 = sand.u32 %s53, 1
          %s136 = scalar_lea.sflag [#allocation6], %s135
          %s137 = sand.u32 %s53, 1
          %s138 = smul.addr %s137, 8
          %s139 = scalar_lea.vmem [#allocation5], %s138
          %s141 = ssub.s32 128, 128
          %142 = vsyncadd %s136, %s141
          %s143 = smul.addr %s17, 128
          %s144 = scalar_lea.hbm %s1, %s143
          %s146 = sshll.u32 %s139, 4
          %s147 = int_to_ptr.vmem [resolvable:$true] %s146
          %149 = dma.hbm_to_vmem [thread:$0]  %s144, 128, %s147, %s136
        $region24: #{tpu_custom_call.1} parent=15 // pred_fallthru
          _
      $region16: #{tpu_custom_call.1} parent=5 // pred_fallthru
        _
      %p150 = scmp.le.s32.totalorder 1, %s17
      %p151 = scmp.lt.s32.totalorder %s17, 3
      %p152 = pnand %p150, %p151
      %p153 = pneg %p152
      // Predicated region
      $region25: #{tpu_custom_call.1} parent=5 // pred_check
        _
      $region26: #{tpu_custom_call.1} parent=5 // pred_check_branch
        %155 = sbr.rel (%p152) target = $region28
      $region27: #{tpu_custom_call.1} parent=5 // pred_region
        %s156 = ssub.s32 %s17, 1
        %s157 = sand.u32 %s30, 1
        %s158 = scalar_lea.sflag [#allocation3], %s157
        %s159 = sand.u32 %s30, 1
        %s160 = smul.addr %s159, 8
        %s161 = scalar_lea.vmem [#allocation2], %s160
        // Predicated region
        $region29: #{tpu_custom_call.1} parent=27 // pred_check
          %p162 = pneg %p43
        $region30: #{tpu_custom_call.1} parent=27 // pred_check_branch
          %164 = sbr.rel (%p162) target = $region32
        $region31: #{tpu_custom_call.1} parent=27 // pred_region
          %165 = dma.done %s158, 128
        $region32: #{tpu_custom_call.1} parent=27 // pred_fallthru
          _
        %s166 = sand.u32 %s56, 1
        %s167 = scalar_lea.sflag [#allocation6], %s166
        %s168 = sand.u32 %s56, 1
        %s169 = smul.addr %s168, 8
        %s170 = scalar_lea.vmem [#allocation5], %s169
        // Predicated region
        $region33: #{tpu_custom_call.1} parent=27 // pred_check
          %p171 = pneg %p69
        $region34: #{tpu_custom_call.1} parent=27 // pred_check_branch
          %173 = sbr.rel (%p171) target = $region36
        $region35: #{tpu_custom_call.1} parent=27 // pred_region
          %174 = dma.done %s167, 128
        $region36: #{tpu_custom_call.1} parent=27 // pred_fallthru
          _
        %s175 = sand.u32 %s30, 1
        %s176 = scalar_lea.sflag [#allocation3], %s175
        %s177 = sand.u32 %s30, 1
        %s178 = smul.addr %s177, 8
        %s179 = scalar_lea.vmem [#allocation2], %s178
        %p180 = pneg %p43
        %p181 = pneg %p40
        %s182 = sand.u32 %s56, 1
        %s183 = scalar_lea.sflag [#allocation6], %s182
        %s184 = sand.u32 %s56, 1
        %s185 = smul.addr %s184, 8
        %s186 = scalar_lea.vmem [#allocation5], %s185
        %p187 = pneg %p69
        %p188 = pneg %p66
        %p189 = pneg %p95
        %p190 = pneg %p92
        %s191 = sand.u32 %s82, 1
        %s192 = scalar_lea.sflag [#allocation4], %s191
        %s193 = sand.u32 %s82, 1
        %s194 = smul.addr %s193, 8
        %s195 = scalar_lea.vmem [#allocation7], %s194
        %v196 = vld [vmem:[%s161] sm:$0xff]
        %v197 = vld [vmem:[%s170] sm:$0xff]
        %v198 = vsub.f32 %v197, %v196
        %v199 = vand.u32 2147483647, %v198
        %v200 = vsub.f32 2.1, %v197
        %vm201 = vcmp.lt.f32.partialorder %v199, 0.5
        %v202 = vmul.f32 %v199, 0.071428575
        %v203 = vlog2.pop %v202
        %v204 = vmul.f32 %v203, 0.6931472
        %v205 = vsel %vm201, %v204, -0.6931472
        %v206 = vmul.f32 %v200, %v205
        %v207 = vmul.f32 %v206, 1.442695
        %v208 = vpow.pop %v207
        %v209 = vadd.f32 %v208, 1.0
        %v210 = vlog2.pop %v209
        %v211 = vmul.f32 %v210, 0.6931472
        %v212 = vmul.f32 -0.5, %v208
        %v213 = vadd.f32 %v212, 1.0
        %v214 = vmul.f32 %v213, %v208
        %v215 = vand.u32 2147483647, %v208
        %vm216 = vcmp.lt.f32.partialorder %v215, 0.0004427343
        %v217 = vsel %vm216, %v214, %v211
        %v218 = vmul.f32 %v217, 14.0
        %v219 = vmul.f32 %v200, 28.0
        %v220 = vadd.f32 %v208, 1.0
        %v221 = vrcp.pop %v220
        %v222 = vmul.f32 %v208, %v221
        %v223 = vmul.f32 %v219, %v222
        %v224 = vsub.f32 %v199, 0.5
        %v225 = vmul.f32 %v223, %v224
        %v226 = vsel %vm201, 0.0, %v225
        %v227 = vadd.f32 %v218, %v226
        %v228 = vadd.f32 %v227, 0.0
        %v229 = vadd.f32 %v228, 0.0
        %230 = vst [vmem:[%s195] sm:$0xff] %v229
        %s231 = sand.u32 %s82, 1
        %s232 = scalar_lea.sflag [#allocation4], %s231
        %s233 = sand.u32 %s82, 1
        %s234 = smul.addr %s233, 8
        %s235 = scalar_lea.vmem [#allocation7], %s234
        // Predicated region
        $region37: #{tpu_custom_call.1} parent=27 // pred_check
          %p236 = pneg %p92
        $region38: #{tpu_custom_call.1} parent=27 // pred_check_branch
          %238 = sbr.rel (%p236) target = $region40
        $region39: #{tpu_custom_call.1} parent=27 // pred_region
          %s240 = ssub.s32 128, 128
          %241 = vsyncadd %s232, %s240
          %s242 = smul.addr %s22, 128
          %s243 = scalar_lea.hbm %s2, %s242
          %s245 = sshll.u32 %s235, 4
          %s246 = int_to_ptr.vmem [resolvable:$true] %s245
          %248 = dma.vmem_to_hbm [thread:$0]  %s246, 128, %s243, %s232
        $region40: #{tpu_custom_call.1} parent=27 // pred_fallthru
          _
      $region28: #{tpu_custom_call.1} parent=5 // pred_fallthru
        _
      %p249 = scmp.le.s32.totalorder 2, %s17
      // Predicated region
      $region41: #{tpu_custom_call.1} parent=5 // pred_check
        %p250 = pneg %p249
      $region42: #{tpu_custom_call.1} parent=5 // pred_check_branch
        %252 = sbr.rel (%p250) target = $region44
      $region43: #{tpu_custom_call.1} parent=5 // pred_region
        %s253 = ssub.s32 %s17, 2
        // Predicated region
        $region45: #{tpu_custom_call.1} parent=43 // pred_check
          %p254 = pneg %p98
        $region46: #{tpu_custom_call.1} parent=43 // pred_check_branch
          %256 = sbr.rel (%p254) target = $region48
        $region47: #{tpu_custom_call.1} parent=43 // pred_region
          %s257 = sand.u32 %s83, 1
          %s258 = scalar_lea.sflag [#allocation4], %s257
          %s259 = sand.u32 %s83, 1
          %s260 = smul.addr %s259, 8
          %s261 = scalar_lea.vmem [#allocation7], %s260
          %262 = dma.done %s258, 128
        $region48: #{tpu_custom_call.1} parent=43 // pred_fallthru
          _
      $region44: #{tpu_custom_call.1} parent=5 // pred_fallthru
        _
    $region6: #{tpu_custom_call.1} parent=1 // loop_footer
      %s21 = sadd.s32 1, %s17
    $region7: #{tpu_custom_call.1} parent=1 // loop_footer_branch
      %16 = sbr.rel target = $region3
    $region8: #{tpu_custom_call.1} parent=1 // loop_exit
      _
    %263 = vsyncpa [#allocation3], 1
    %s264 = scalar_lea.sflag [#allocation3], 1
    %265 = vsyncpa %s264, 1
    %266 = vsyncpa [#allocation6], 1
    %s267 = scalar_lea.sflag [#allocation6], 1
    %268 = vsyncpa %s267, 1
    %269 = vsyncpa [#allocation4], 1
    %s270 = scalar_lea.sflag [#allocation4], 1
    %271 = vsyncpa %s270, 1

</llo_original>
